<compile_context>
chip_gen: v7x
topology: tpu7x:2x2x1
jax: 0.10.0
libtpu: 0.0.40
codegen_flags: <defaults>
</compile_context>

<pallas_src>
import functools

import jax
import jax.numpy as jnp
from jax.experimental import pallas as pl
from jax.experimental.pallas import tpu as pltpu


def _normal_block_kernel(x_ref, w1_ref, b1_ref, w2_ref, b2_ref, o_ref, midpad_ref,
                         *, H, W, Cmid, Nb):
    f32 = jnp.float32
    bf16 = jnp.bfloat16
    sdt = midpad_ref.dtype  # f32 scratch

    for b in range(Nb):
        # ---- conv1 (3x3, pad=1): 3 full-lane-extent matmuls (kx folded into taps) ----
        acc1 = jnp.dot(x_ref[b, 0:H, :], w1_ref[0], preferred_element_type=f32)
        acc1 = acc1 + jnp.dot(x_ref[b, 1:H + 1, :], w1_ref[1], preferred_element_type=f32)
        acc1 = acc1 + jnp.dot(x_ref[b, 2:H + 2, :], w1_ref[2], preferred_element_type=f32)
        h = jnp.maximum(acc1 + b1_ref[...], 0.0)                     # (H, W*Cmid) f32

        # ---- re-pad intermediate for conv2 in VMEM scratch (border-only zeroing) ----
        midpad_ref[b, 0:1, :] = jnp.zeros((1, (W + 2) * Cmid), sdt)
        midpad_ref[b, H + 1:H + 2, :] = jnp.zeros((1, (W + 2) * Cmid), sdt)
        midpad_ref[b, :, 0:Cmid] = jnp.zeros((H + 2, Cmid), sdt)
        midpad_ref[b, :, (W + 1) * Cmid:(W + 2) * Cmid] = jnp.zeros((H + 2, Cmid), sdt)
        midpad_ref[b, 1:H + 1, Cmid:(W + 1) * Cmid] = h.astype(sdt)

        # ---- conv2 (3x3, pad=1): 3 full-lane-extent matmuls; BN folded; ReLU ----
        acc2 = jnp.dot(midpad_ref[b, 0:H, :].astype(bf16), w2_ref[0],
                       preferred_element_type=f32)
        acc2 = acc2 + jnp.dot(midpad_ref[b, 1:H + 1, :].astype(bf16), w2_ref[1],
                              preferred_element_type=f32)
        acc2 = acc2 + jnp.dot(midpad_ref[b, 2:H + 2, :].astype(bf16), w2_ref[2],
                              preferred_element_type=f32)
        o_ref[b] = jnp.maximum(acc2 + b2_ref[...], 0.0).astype(o_ref.dtype)


def _fold_bn(w, gamma, beta, mean, var, eps=1e-5):
    # w: (Cout, Cin, 3, 3) OIHW. Inference BN folded into a per-output-channel
    # scale on w plus an additive bias (conv has no bias of its own).
    scale = gamma / jnp.sqrt(var + eps)
    bias = beta - mean * scale
    return w * scale[:, None, None, None], bias


def _expand_taps_ky(w, W):
    # w: (Cout, Cin, 3, 3) OIHW.  Fold the kx shift into per-ky banded tap matrices:
    #   T[ky, xi*Cin + ci, xo*Cout + co] = w[co, ci, ky, xi - xo],  xi - xo in {0,1,2}
    # so each conv layer becomes   sum_ky  pad[ky:ky+H, :] @ T[ky]
    # acting on the lane-packed padded slab (column = x*Cin + ci, x in [0, W+2)).
    wt = jnp.transpose(w, (2, 3, 1, 0))                               # (3, 3, Cin, Cout)
    S = jnp.stack([jnp.eye(W + 2, W, k=-kx, dtype=w.dtype) for kx in range(3)])
    T = jnp.einsum('klio,lpq->kpiqo', wt, S)                          # (3, W+2, Cin, W, Cout)
    Cin, Cout = wt.shape[2], wt.shape[3]
    return T.reshape(3, (W + 2) * Cin, W * Cout)


def normal_block_forward(x, params):
    """Forward pass of HRNet NormalBlock on an NCHW input (inference-mode BN)."""
    N, Cin, H, W = x.shape
    w1, g1, be1, m1, v1 = (params[k] for k in ('w1', 'gamma1', 'beta1', 'mean1', 'var1'))
    w2, g2, be2, m2, v2 = (params[k] for k in ('w2', 'gamma2', 'beta2', 'mean2', 'var2'))
    Cmid, Cout = w1.shape[0], w2.shape[0]
    f32, bf16 = jnp.float32, jnp.bfloat16

    # Fold inference BN into conv weights, expand taps, cast MXU operands to bf16.
    w1f, bias1 = _fold_bn(w1.astype(f32), g1, be1, m1, v1)
    w2f, bias2 = _fold_bn(w2.astype(f32), g2, be2, m2, v2)
    w1e = _expand_taps_ky(w1f, W).astype(bf16)      # (3, (W+2)*Cin,  W*Cmid)
    w2e = _expand_taps_ky(w2f, W).astype(bf16)      # (3, (W+2)*Cmid, W*Cout)
    b1p = jnp.tile(bias1, W).reshape(1, W * Cmid).astype(f32)
    b2p = jnp.tile(bias2, W).reshape(1, W * Cout).astype(f32)

    # NCHW -> NHWC -> zero-pad H,W by 1 -> lane-dense (N, H+2, (W+2)*Cin) bf16 slab.
    x_nhwc = jnp.transpose(x, (0, 2, 3, 1)).astype(f32)
    x_pad = jnp.pad(x_nhwc, ((0, 0), (1, 1), (1, 1), (0, 0)))
    x_p = x_pad.reshape(N, H + 2, (W + 2) * Cin).astype(bf16)

    # Batch tile: aim for ~256 LHS rows per step, but keep grid >= 2 so v7x's two
    # TensorCores still split the batch.  (N=2, H=16 -> Nb=1, grid=(2,).)
    nb_cap = max(1, min(-(-256 // H), N // 2))
    Nb = max(d for d in range(1, N + 1) if N % d == 0 and d <= nb_cap)
    steps = N // Nb

    kernel = functools.partial(_normal_block_kernel, H=H, W=W, Cmid=Cmid, Nb=Nb)

    # Dense MXU flops of the block-banded decomposition (what actually executes).
    flops = 2 * N * 3 * H * (W + 2) * W * (Cin * Cmid + Cmid * Cout)
    bytes_accessed = (x_p.size * 2 + w1e.size * 2 + w2e.size * 2
                      + b1p.size * 4 + b2p.size * 4 + N * H * W * Cout * 4)

    out_p = pl.pallas_call(
        kernel,
        out_shape=jax.ShapeDtypeStruct((N, H, W * Cout), f32),
        grid=(steps,),
        in_specs=[
            pl.BlockSpec((Nb, H + 2, (W + 2) * Cin), lambda n: (n, 0, 0)),
            pl.BlockSpec((3, (W + 2) * Cin, W * Cmid), lambda n: (0, 0, 0)),
            pl.BlockSpec((1, W * Cmid), lambda n: (0, 0)),
            pl.BlockSpec((3, (W + 2) * Cmid, W * Cout), lambda n: (0, 0, 0)),
            pl.BlockSpec((1, W * Cout), lambda n: (0, 0)),
        ],
        out_specs=pl.BlockSpec((Nb, H, W * Cout), lambda n: (n, 0, 0)),
        scratch_shapes=[
            pltpu.VMEM((Nb, H + 2, (W + 2) * Cmid), f32),   # zero-padded intermediate
        ],
        compiler_params=pltpu.CompilerParams(
            dimension_semantics=("parallel",),
            vmem_limit_bytes=32 * 1024 * 1024,
        ),
        cost_estimate=pl.CostEstimate(flops=flops, transcendentals=0,
                                      bytes_accessed=bytes_accessed),
    )(x_p, w1e, b1p, w2e, b2p)

    # (N, H, W*Cout) -> NCHW
    out = out_p.reshape(N, H, W, Cout).transpose(0, 3, 1, 2)
    return out.astype(x.dtype)


if __name__ == "__main__":
    key = jax.random.PRNGKey(0)
    N, Cin, Cmid, Cout, H, W = 2, 4, 8, 8, 16, 16
    ks = jax.random.split(key, 11)

    x = jax.random.normal(ks[0], (N, Cin, H, W), dtype=jnp.float32)
    params = dict(
        w1=0.2 * jax.random.normal(ks[1], (Cmid, Cin, 3, 3), jnp.float32),
        gamma1=jax.random.uniform(ks[2], (Cmid,), jnp.float32, 0.5, 1.5),
        beta1=0.1 * jax.random.normal(ks[3], (Cmid,), jnp.float32),
        mean1=0.1 * jax.random.normal(ks[4], (Cmid,), jnp.float32),
        var1=jax.random.uniform(ks[5], (Cmid,), jnp.float32, 0.5, 1.5),
        w2=0.2 * jax.random.normal(ks[6], (Cout, Cmid, 3, 3), jnp.float32),
        gamma2=jax.random.uniform(ks[7], (Cout,), jnp.float32, 0.5, 1.5),
        beta2=0.1 * jax.random.normal(ks[8], (Cout,), jnp.float32),
        mean2=0.1 * jax.random.normal(ks[9], (Cout,), jnp.float32),
        var2=jax.random.uniform(ks[10], (Cout,), jnp.float32, 0.5, 1.5),
    )

    y = normal_block_forward(x, params)
    jax.block_until_ready(y)

    # Pure-JAX f32 reference (inference-mode BatchNorm) for validation.
    def ref_block(h, w, gamma, beta, mean, var, eps=1e-5):
        z = jax.lax.conv_general_dilated(
            h, w, window_strides=(1, 1), padding=((1, 1), (1, 1)),
            dimension_numbers=('NCHW', 'OIHW', 'NCHW'),
            precision=jax.lax.Precision.HIGHEST)
        z = (z - mean[None, :, None, None]) / jnp.sqrt(var + eps)[None, :, None, None]
        z = z * gamma[None, :, None, None] + beta[None, :, None, None]
        return jnp.maximum(z, 0.0)

    y_ref = ref_block(x, params['w1'], params['gamma1'], params['beta1'],
                      params['mean1'], params['var1'])
    y_ref = ref_block(y_ref, params['w2'], params['gamma2'], params['beta2'],
                      params['mean2'], params['var2'])

    assert y.shape == (N, Cout, H, W) and y.dtype == x.dtype
    max_err = float(jnp.max(jnp.abs(y - y_ref)))
    # Kernel runs bf16 MXU operands (per perf review) with f32 accumulation; compare
    # against an f32 HIGHEST-precision reference with a bf16-appropriate tolerance.
    assert bool(jnp.allclose(y, y_ref, rtol=2e-2, atol=5e-2)), f"max abs err = {max_err}"
    print("KERNEL_OK")
</pallas_src>

<mosaic_0001>
module attributes {stable_mosaic.version = 11 : i64} {
  func.func @_normal_block_kernel(%arg0: i32, %arg1: memref<1x18x72xbf16, #tpu.memory_space<vmem>>, %arg2: memref<3x72x128xbf16, #tpu.memory_space<vmem>>, %arg3: memref<1x128xf32, #tpu.memory_space<vmem>>, %arg4: memref<3x144x128xbf16, #tpu.memory_space<vmem>>, %arg5: memref<1x128xf32, #tpu.memory_space<vmem>>, %arg6: memref<1x16x128xf32, #tpu.memory_space<vmem>>, %arg7: memref<1x18x144xf32, #tpu.memory_space<vmem>>) attributes {dimension_semantics = [#tpu.dimension_semantics<parallel>], iteration_bounds = array<i64: 2>, scalar_prefetch = 0 : i64, scratch_operands = 1 : i64, tpu.core_type = #tpu.core_type<tc>, window_params = [{transform_indices = @transform_0, window_bounds = array<i64: 1, 18, 72>}, {pipeline_mode = #tpu.pipeline_mode<synchronous>, transform_indices = @transform_1, window_bounds = array<i64: 3, 72, 128>}, {pipeline_mode = #tpu.pipeline_mode<synchronous>, transform_indices = @transform_2, window_bounds = array<i64: 1, 128>}, {pipeline_mode = #tpu.pipeline_mode<synchronous>, transform_indices = @transform_3, window_bounds = array<i64: 3, 144, 128>}, {pipeline_mode = #tpu.pipeline_mode<synchronous>, transform_indices = @transform_4, window_bounds = array<i64: 1, 128>}, {transform_indices = @transform_5, window_bounds = array<i64: 1, 16, 128>}]} {
    %c0 = arith.constant 0 : index
    %c0_0 = arith.constant 0 : index
    %c0_1 = arith.constant 0 : index
    %0 = vector.load %arg1[%c0, %c0_0, %c0_1] : memref<1x18x72xbf16, #tpu.memory_space<vmem>>, vector<1x16x72xbf16>
    %1 = vector.shape_cast %0 : vector<1x16x72xbf16> to vector<16x72xbf16>
    %c0_2 = arith.constant 0 : index
    %c0_3 = arith.constant 0 : index
    %c0_4 = arith.constant 0 : index
    %2 = vector.load %arg2[%c0_2, %c0_3, %c0_4] : memref<3x72x128xbf16, #tpu.memory_space<vmem>>, vector<1x72x128xbf16>
    %3 = vector.shape_cast %2 : vector<1x72x128xbf16> to vector<72x128xbf16>
    %cst = arith.constant dense<0.000000e+00> : vector<16x128xf32>
    %4 = tpu.matmul %1, %3, %cst {dimension_numbers = #tpu.dot_dimension_numbers<[1], [0], [0], [1], [0, 0, 1, 1], [], []>} : vector<16x72xbf16>, vector<72x128xbf16>, vector<16x128xf32> -> vector<16x128xf32>
    %c0_5 = arith.constant 0 : index
    %c1 = arith.constant 1 : index
    %c0_6 = arith.constant 0 : index
    %5 = vector.load %arg1[%c0_5, %c1, %c0_6] : memref<1x18x72xbf16, #tpu.memory_space<vmem>>, vector<1x16x72xbf16>
    %6 = vector.shape_cast %5 : vector<1x16x72xbf16> to vector<16x72xbf16>
    %c1_7 = arith.constant 1 : index
    %c0_8 = arith.constant 0 : index
    %c0_9 = arith.constant 0 : index
    %7 = vector.load %arg2[%c1_7, %c0_8, %c0_9] : memref<3x72x128xbf16, #tpu.memory_space<vmem>>, vector<1x72x128xbf16>
    %8 = vector.shape_cast %7 : vector<1x72x128xbf16> to vector<72x128xbf16>
    %cst_10 = arith.constant dense<0.000000e+00> : vector<16x128xf32>
    %9 = tpu.matmul %6, %8, %cst_10 {dimension_numbers = #tpu.dot_dimension_numbers<[1], [0], [0], [1], [0, 0, 1, 1], [], []>} : vector<16x72xbf16>, vector<72x128xbf16>, vector<16x128xf32> -> vector<16x128xf32>
    %10 = arith.addf %4, %9 : vector<16x128xf32>
    %c0_11 = arith.constant 0 : index
    %c2 = arith.constant 2 : index
    %c0_12 = arith.constant 0 : index
    %11 = vector.load %arg1[%c0_11, %c2, %c0_12] : memref<1x18x72xbf16, #tpu.memory_space<vmem>>, vector<1x16x72xbf16>
    %12 = vector.shape_cast %11 : vector<1x16x72xbf16> to vector<16x72xbf16>
    %c2_13 = arith.constant 2 : index
    %c0_14 = arith.constant 0 : index
    %c0_15 = arith.constant 0 : index
    %13 = vector.load %arg2[%c2_13, %c0_14, %c0_15] : memref<3x72x128xbf16, #tpu.memory_space<vmem>>, vector<1x72x128xbf16>
    %14 = vector.shape_cast %13 : vector<1x72x128xbf16> to vector<72x128xbf16>
    %cst_16 = arith.constant dense<0.000000e+00> : vector<16x128xf32>
    %15 = tpu.matmul %12, %14, %cst_16 {dimension_numbers = #tpu.dot_dimension_numbers<[1], [0], [0], [1], [0, 0, 1, 1], [], []>} : vector<16x72xbf16>, vector<72x128xbf16>, vector<16x128xf32> -> vector<16x128xf32>
    %16 = arith.addf %10, %15 : vector<16x128xf32>
    %c0_17 = arith.constant 0 : index
    %c0_18 = arith.constant 0 : index
    %17 = vector.load %arg3[%c0_17, %c0_18] : memref<1x128xf32, #tpu.memory_space<vmem>>, vector<1x128xf32>
    %18 = vector.broadcast %17 : vector<1x128xf32> to vector<16x128xf32>
    %19 = arith.addf %16, %18 : vector<16x128xf32>
    %cst_19 = arith.constant 0.000000e+00 : f32
    %20 = vector.broadcast %cst_19 : f32 to vector<16x128xf32>
    %21 = arith.maximumf %19, %20 : vector<16x128xf32>
    %cst_20 = arith.constant 0.000000e+00 : f32
    %22 = vector.broadcast %cst_20 : f32 to vector<1x144xf32>
    %c0_21 = arith.constant 0 : index
    %c0_22 = arith.constant 0 : index
    %c0_23 = arith.constant 0 : index
    %23 = vector.load %arg7[%c0_21, %c0_22, %c0_23] : memref<1x18x144xf32, #tpu.memory_space<vmem>>, vector<1x1x144xf32>
    %24 = vector.shape_cast %23 : vector<1x1x144xf32> to vector<1x144xf32>
    %25 = vector.shape_cast %22 : vector<1x144xf32> to vector<1x1x144xf32>
    tpu.vector_store %arg7[%c0_21, %c0_22, %c0_23], %25 {strides = array<i32>} : memref<1x18x144xf32, #tpu.memory_space<vmem>>, vector<1x1x144xf32>,
    %cst_24 = arith.constant 0.000000e+00 : f32
    %26 = vector.broadcast %cst_24 : f32 to vector<1x144xf32>
    %c0_25 = arith.constant 0 : index
    %c17 = arith.constant 17 : index
    %c0_26 = arith.constant 0 : index
    %27 = vector.load %arg7[%c0_25, %c17, %c0_26] : memref<1x18x144xf32, #tpu.memory_space<vmem>>, vector<1x1x144xf32>
    %28 = vector.shape_cast %27 : vector<1x1x144xf32> to vector<1x144xf32>
    %29 = vector.shape_cast %26 : vector<1x144xf32> to vector<1x1x144xf32>
    tpu.vector_store %arg7[%c0_25, %c17, %c0_26], %29 {strides = array<i32>} : memref<1x18x144xf32, #tpu.memory_space<vmem>>, vector<1x1x144xf32>,
    %cst_27 = arith.constant 0.000000e+00 : f32
    %30 = vector.broadcast %cst_27 : f32 to vector<18x8xf32>
    %c0_28 = arith.constant 0 : index
    %c0_29 = arith.constant 0 : index
    %c0_30 = arith.constant 0 : index
    %31 = vector.load %arg7[%c0_28, %c0_29, %c0_30] : memref<1x18x144xf32, #tpu.memory_space<vmem>>, vector<1x18x8xf32>
    %32 = vector.shape_cast %31 : vector<1x18x8xf32> to vector<18x8xf32>
    %33 = vector.shape_cast %30 : vector<18x8xf32> to vector<1x18x8xf32>
    tpu.vector_store %arg7[%c0_28, %c0_29, %c0_30], %33 {strides = array<i32>} : memref<1x18x144xf32, #tpu.memory_space<vmem>>, vector<1x18x8xf32>,
    %cst_31 = arith.constant 0.000000e+00 : f32
    %34 = vector.broadcast %cst_31 : f32 to vector<18x8xf32>
    %c0_32 = arith.constant 0 : index
    %c0_33 = arith.constant 0 : index
    %c136 = arith.constant 136 : index
    %35 = vector.load %arg7[%c0_32, %c0_33, %c136] : memref<1x18x144xf32, #tpu.memory_space<vmem>>, vector<1x18x8xf32>
    %36 = vector.shape_cast %35 : vector<1x18x8xf32> to vector<18x8xf32>
    %37 = vector.shape_cast %34 : vector<18x8xf32> to vector<1x18x8xf32>
    tpu.vector_store %arg7[%c0_32, %c0_33, %c136], %37 {strides = array<i32>} : memref<1x18x144xf32, #tpu.memory_space<vmem>>, vector<1x18x8xf32>,
    %c0_34 = arith.constant 0 : index
    %c1_35 = arith.constant 1 : index
    %c8 = arith.constant 8 : index
    %38 = vector.load %arg7[%c0_34, %c1_35, %c8] : memref<1x18x144xf32, #tpu.memory_space<vmem>>, vector<1x16x128xf32>
    %39 = vector.shape_cast %38 : vector<1x16x128xf32> to vector<16x128xf32>
    %40 = vector.shape_cast %21 : vector<16x128xf32> to vector<1x16x128xf32>
    tpu.vector_store %arg7[%c0_34, %c1_35, %c8], %40 {strides = array<i32>} : memref<1x18x144xf32, #tpu.memory_space<vmem>>, vector<1x16x128xf32>,
    %c0_36 = arith.constant 0 : index
    %c0_37 = arith.constant 0 : index
    %c0_38 = arith.constant 0 : index
    %41 = vector.load %arg7[%c0_36, %c0_37, %c0_38] : memref<1x18x144xf32, #tpu.memory_space<vmem>>, vector<1x16x144xf32>
    %42 = vector.shape_cast %41 : vector<1x16x144xf32> to vector<16x144xf32>
    %43 = arith.truncf %42 : vector<16x144xf32> to vector<16x144xbf16>
    %c0_39 = arith.constant 0 : index
    %c0_40 = arith.constant 0 : index
    %c0_41 = arith.constant 0 : index
    %44 = vector.load %arg4[%c0_39, %c0_40, %c0_41] : memref<3x144x128xbf16, #tpu.memory_space<vmem>>, vector<1x144x128xbf16>
    %45 = vector.shape_cast %44 : vector<1x144x128xbf16> to vector<144x128xbf16>
    %cst_42 = arith.constant dense<0.000000e+00> : vector<16x128xf32>
    %46 = tpu.matmul %43, %45, %cst_42 {dimension_numbers = #tpu.dot_dimension_numbers<[1], [0], [0], [1], [0, 0, 1, 1], [], []>} : vector<16x144xbf16>, vector<144x128xbf16>, vector<16x128xf32> -> vector<16x128xf32>
    %c0_43 = arith.constant 0 : index
    %c1_44 = arith.constant 1 : index
    %c0_45 = arith.constant 0 : index
    %47 = vector.load %arg7[%c0_43, %c1_44, %c0_45] : memref<1x18x144xf32, #tpu.memory_space<vmem>>, vector<1x16x144xf32>
    %48 = vector.shape_cast %47 : vector<1x16x144xf32> to vector<16x144xf32>
    %49 = arith.truncf %48 : vector<16x144xf32> to vector<16x144xbf16>
    %c1_46 = arith.constant 1 : index
    %c0_47 = arith.constant 0 : index
    %c0_48 = arith.constant 0 : index
    %50 = vector.load %arg4[%c1_46, %c0_47, %c0_48] : memref<3x144x128xbf16, #tpu.memory_space<vmem>>, vector<1x144x128xbf16>
    %51 = vector.shape_cast %50 : vector<1x144x128xbf16> to vector<144x128xbf16>
    %cst_49 = arith.constant dense<0.000000e+00> : vector<16x128xf32>
    %52 = tpu.matmul %49, %51, %cst_49 {dimension_numbers = #tpu.dot_dimension_numbers<[1], [0], [0], [1], [0, 0, 1, 1], [], []>} : vector<16x144xbf16>, vector<144x128xbf16>, vector<16x128xf32> -> vector<16x128xf32>
    %53 = arith.addf %46, %52 : vector<16x128xf32>
    %c0_50 = arith.constant 0 : index
    %c2_51 = arith.constant 2 : index
    %c0_52 = arith.constant 0 : index
    %54 = vector.load %arg7[%c0_50, %c2_51, %c0_52] : memref<1x18x144xf32, #tpu.memory_space<vmem>>, vector<1x16x144xf32>
    %55 = vector.shape_cast %54 : vector<1x16x144xf32> to vector<16x144xf32>
    %56 = arith.truncf %55 : vector<16x144xf32> to vector<16x144xbf16>
    %c2_53 = arith.constant 2 : index
    %c0_54 = arith.constant 0 : index
    %c0_55 = arith.constant 0 : index
    %57 = vector.load %arg4[%c2_53, %c0_54, %c0_55] : memref<3x144x128xbf16, #tpu.memory_space<vmem>>, vector<1x144x128xbf16>
    %58 = vector.shape_cast %57 : vector<1x144x128xbf16> to vector<144x128xbf16>
    %cst_56 = arith.constant dense<0.000000e+00> : vector<16x128xf32>
    %59 = tpu.matmul %56, %58, %cst_56 {dimension_numbers = #tpu.dot_dimension_numbers<[1], [0], [0], [1], [0, 0, 1, 1], [], []>} : vector<16x144xbf16>, vector<144x128xbf16>, vector<16x128xf32> -> vector<16x128xf32>
    %60 = arith.addf %53, %59 : vector<16x128xf32>
    %c0_57 = arith.constant 0 : index
    %c0_58 = arith.constant 0 : index
    %61 = vector.load %arg5[%c0_57, %c0_58] : memref<1x128xf32, #tpu.memory_space<vmem>>, vector<1x128xf32>
    %62 = vector.broadcast %61 : vector<1x128xf32> to vector<16x128xf32>
    %63 = arith.addf %60, %62 : vector<16x128xf32>
    %cst_59 = arith.constant 0.000000e+00 : f32
    %64 = vector.broadcast %cst_59 : f32 to vector<16x128xf32>
    %65 = arith.maximumf %63, %64 : vector<16x128xf32>
    %c0_60 = arith.constant 0 : index
    %c0_61 = arith.constant 0 : index
    %c0_62 = arith.constant 0 : index
    %66 = vector.load %arg6[%c0_60, %c0_61, %c0_62] : memref<1x16x128xf32, #tpu.memory_space<vmem>>, vector<1x16x128xf32>
    %67 = vector.shape_cast %66 : vector<1x16x128xf32> to vector<16x128xf32>
    %68 = vector.shape_cast %65 : vector<16x128xf32> to vector<1x16x128xf32>
    tpu.vector_store %arg6[%c0_60, %c0_61, %c0_62], %68 {strides = array<i32>} : memref<1x16x128xf32, #tpu.memory_space<vmem>>, vector<1x16x128xf32>,
    return
  }
  func.func @transform_0(%arg0: i32) -> (i32, i32, i32) {
    %c0_i32 = arith.constant 0 : i32
    %c0_i32_0 = arith.constant 0 : i32
    %c0_i32_1 = arith.constant 0 : i32
    return %arg0, %c0_i32, %c0_i32_0 : i32, i32, i32
  }
  func.func @transform_1(%arg0: i32) -> (i32, i32, i32) {
    %c0_i32 = arith.constant 0 : i32
    %c0_i32_0 = arith.constant 0 : i32
    %c0_i32_1 = arith.constant 0 : i32
    %c0_i32_2 = arith.constant 0 : i32
    return %c0_i32, %c0_i32_0, %c0_i32_1 : i32, i32, i32
  }
  func.func @transform_2(%arg0: i32) -> (i32, i32) {
    %c0_i32 = arith.constant 0 : i32
    %c0_i32_0 = arith.constant 0 : i32
    %c0_i32_1 = arith.constant 0 : i32
    return %c0_i32, %c0_i32_0 : i32, i32
  }
  func.func @transform_3(%arg0: i32) -> (i32, i32, i32) {
    %c0_i32 = arith.constant 0 : i32
    %c0_i32_0 = arith.constant 0 : i32
    %c0_i32_1 = arith.constant 0 : i32
    %c0_i32_2 = arith.constant 0 : i32
    return %c0_i32, %c0_i32_0, %c0_i32_1 : i32, i32, i32
  }
  func.func @transform_4(%arg0: i32) -> (i32, i32) {
    %c0_i32 = arith.constant 0 : i32
    %c0_i32_0 = arith.constant 0 : i32
    %c0_i32_1 = arith.constant 0 : i32
    return %c0_i32, %c0_i32_0 : i32, i32
  }
  func.func @transform_5(%arg0: i32) -> (i32, i32, i32) {
    %c0_i32 = arith.constant 0 : i32
    %c0_i32_0 = arith.constant 0 : i32
    %c0_i32_1 = arith.constant 0 : i32
    return %arg0, %c0_i32, %c0_i32_0 : i32, i32, i32
  }
}

</mosaic_0001>

<llo_original>
// kernel: tpu_custom_call.1
$region0: #{tpu_custom_call.1}
  #allocation0 [shape = 'u32[]', space=smem, size = 0x4, offset = 0x4, fixed_abs, tag = 'smem constant byte address 0x4 - core index']
  #allocation1 [shape = 'u32[144,128]{1,0:T(1,128)}', space=vmem, size = 0x12000, scoped, tag = 'internal scratch']
  #allocation2 [shape = 'f32[1,18,144]{2,1,0:T(8,128)}', space=vmem, size = 0x6000, scoped, tag = 'scratch operand']
  %s0 = inlined_call_operand.vmem [shape: bf16[2,18,72], index: 0, kind: input, shape index: {}]
  %s1 = inlined_call_operand.hbm [shape: bf16[3,72,128], index: 1, kind: input, shape index: {}]
  %s2 = inlined_call_operand.vmem [shape: f32[1,128], index: 2, kind: input, shape index: {}]
  %s3 = inlined_call_operand.hbm [shape: bf16[3,144,128], index: 3, kind: input, shape index: {}]
  %s4 = inlined_call_operand.vmem [shape: f32[1,128], index: 4, kind: input, shape index: {}]
  %s5 = inlined_call_operand.hbm [shape: f32[2,16,128], index: 5, kind: output, shape index: {}]
  %s6 = sld [smem:[#allocation0]]
  $region61: #{tpu_custom_call.1} parent=0
    _
  %s8 = ssub.s32 1, %s6
  %s9 = scalar_select 0, %s8, %s6
  $region1: #{tpu_custom_call.1} parent=0
    #allocation3 [shape = 'u8[55296]{0}', space=vmem, size = 0xd800, scoped, tag = 'input window, operand 1, single buffered']
    #allocation4 [shape = 's32[2]{0}', space=sflag, size = 0x8, scoped, tag = 'scoped memory for tpu_custom_call.1']
    #allocation5 [shape = 's32[2]{0}', space=sflag, size = 0x8, scoped, tag = 'scoped memory for tpu_custom_call.1']
    #allocation6 [shape = 'u8[110592]{0}', space=vmem, size = 0x1b000, scoped, tag = 'input window, operand 3, single buffered']
    #allocation7 [shape = 's32[1]{0}', space=sflag, size = 0x4, scoped, tag = 'scoped memory for tpu_custom_call.1']
    #allocation8 [shape = 'u8[16384]{0}', space=vmem, size = 0x4000, scoped, tag = 'output window, operand 0']
    %10 = vsyncpa [#allocation4], 0
    %11 = vsyncpa [#allocation7], 0
    %12 = vsyncpa [#allocation5], 0
    %s13 = scalar_lea.sflag [#allocation5], 1
    %14 = vsyncpa %s13, 0
    loop: start=0, step=1, limit=4
    $region2: #{tpu_custom_call.1} parent=1 // loop_pre_header
      _
    $region3: #{tpu_custom_call.1} parent=1 // loop_header
      %s16 = sphi 0, %s20
      %p17 = scmp.ge.s32.totalorder %s16, 4
      %s26 = sphi 0, %s28
      %s29 = sphi 0, %s26
      %s30 = sphi 0, %s29
      %s46 = sphi 0, %s30
      %s50 = sphi 0, %s50
      %s52 = sphi 0, %s50
      %s53 = sphi 0, %s52
      %s67 = sphi 0, %s53
      %s71 = sphi 0, %s71
      %s73 = sphi 0, %s71
      %s74 = sphi 0, %s73
      %s88 = sphi 0, %s74
      %s92 = sphi 0, %s92
      %s94 = sphi 0, %s92
      %s95 = sphi 0, %s94
      %s109 = sphi 0, %s95
      %s113 = sphi 0, %s113
      %s115 = sphi 0, %s113
      %s116 = sphi 0, %s115
      %s130 = sphi 0, %s116
      %s136 = sphi 0, %s138
      %s139 = sphi 0, %s136
      %s140 = sphi 0, %s139
      %s156 = sphi 0, %s140
    $region4: #{tpu_custom_call.1} parent=1 // loop_header_branch
      %19 = sbr.rel (%p17) target = $region8
    $region5: #{tpu_custom_call.1} parent=1 // loop_body
      %s21 = ssub.s32 %s16, 1
      %s22 = ssub.s32 %s16, 2
      %s23 = sadd.s32 %s16, 1
      %s24 = ssub.s32 %s16, %s23
      %p25 = scmp.eq.s32.totalorder %s24, 0
      %s27 = sadd.s32 %s26, 1
      %s28 = scalar_select %p25, %s26, %s27
      %p31 = pneg %p25
      %p32 = scmp.eq.s32.totalorder %s16, 1
      %p33 = por %p31, %p32
      %p34 = scmp.ne.s32.totalorder %s26, %s29
      %p35 = scmp.eq.s32.totalorder %s16, 0
      %p36 = por %p34, %p35
      %p37 = scmp.ne.s32.totalorder %s26, %s29
      %p38 = scmp.eq.s32.totalorder %s21, 1
      %p39 = por %p37, %p38
      %p40 = scmp.ne.s32.totalorder %s29, %s30
      %p41 = scmp.eq.s32.totalorder %s21, 0
      %p42 = por %p40, %p41
      %p43 = scmp.ne.s32.totalorder %s29, %s30
      %p44 = scmp.eq.s32.totalorder %s22, 1
      %p45 = por %p43, %p44
      %p47 = scmp.ne.s32.totalorder %s30, %s46
      %p48 = scmp.eq.s32.totalorder %s22, 0
      %p49 = por %p47, %p48
      %s51 = sadd.s32 %s50, 1
      %p54 = scmp.eq.s32.totalorder %s16, 1
      %p55 = scmp.ne.s32.totalorder %s50, %s52
      %p56 = scmp.eq.s32.totalorder %s16, 0
      %p57 = por %p55, %p56
      %p58 = scmp.ne.s32.totalorder %s50, %s52
      %p59 = scmp.eq.s32.totalorder %s21, 1
      %p60 = por %p58, %p59
      %p61 = scmp.ne.s32.totalorder %s52, %s53
      %p62 = scmp.eq.s32.totalorder %s21, 0
      %p63 = por %p61, %p62
      %p64 = scmp.ne.s32.totalorder %s52, %s53
      %p65 = scmp.eq.s32.totalorder %s22, 1
      %p66 = por %p64, %p65
      %p68 = scmp.ne.s32.totalorder %s53, %s67
      %p69 = scmp.eq.s32.totalorder %s22, 0
      %p70 = por %p68, %p69
      %s72 = sadd.s32 %s71, 1
      %p75 = scmp.eq.s32.totalorder %s16, 1
      %p76 = scmp.ne.s32.totalorder %s71, %s73
      %p77 = scmp.eq.s32.totalorder %s16, 0
      %p78 = por %p76, %p77
      %p79 = scmp.ne.s32.totalorder %s71, %s73
      %p80 = scmp.eq.s32.totalorder %s21, 1
      %p81 = por %p79, %p80
      %p82 = scmp.ne.s32.totalorder %s73, %s74
      %p83 = scmp.eq.s32.totalorder %s21, 0
      %p84 = por %p82, %p83
      %p85 = scmp.ne.s32.totalorder %s73, %s74
      %p86 = scmp.eq.s32.totalorder %s22, 1
      %p87 = por %p85, %p86
      %p89 = scmp.ne.s32.totalorder %s74, %s88
      %p90 = scmp.eq.s32.totalorder %s22, 0
      %p91 = por %p89, %p90
      %s93 = sadd.s32 %s92, 1
      %p96 = scmp.eq.s32.totalorder %s16, 1
      %p97 = scmp.ne.s32.totalorder %s92, %s94
      %p98 = scmp.eq.s32.totalorder %s16, 0
      %p99 = por %p97, %p98
      %p100 = scmp.ne.s32.totalorder %s92, %s94
      %p101 = scmp.eq.s32.totalorder %s21, 1
      %p102 = por %p100, %p101
      %p103 = scmp.ne.s32.totalorder %s94, %s95
      %p104 = scmp.eq.s32.totalorder %s21, 0
      %p105 = por %p103, %p104
      %p106 = scmp.ne.s32.totalorder %s94, %s95
      %p107 = scmp.eq.s32.totalorder %s22, 1
      %p108 = por %p106, %p107
      %p110 = scmp.ne.s32.totalorder %s95, %s109
      %p111 = scmp.eq.s32.totalorder %s22, 0
      %p112 = por %p110, %p111
      %s114 = sadd.s32 %s113, 1
      %p117 = scmp.eq.s32.totalorder %s16, 1
      %p118 = scmp.ne.s32.totalorder %s113, %s115
      %p119 = scmp.eq.s32.totalorder %s16, 0
      %p120 = por %p118, %p119
      %p121 = scmp.ne.s32.totalorder %s113, %s115
      %p122 = scmp.eq.s32.totalorder %s21, 1
      %p123 = por %p121, %p122
      %p124 = scmp.ne.s32.totalorder %s115, %s116
      %p125 = scmp.eq.s32.totalorder %s21, 0
      %p126 = por %p124, %p125
      %p127 = scmp.ne.s32.totalorder %s115, %s116
      %p128 = scmp.eq.s32.totalorder %s22, 1
      %p129 = por %p127, %p128
      %p131 = scmp.ne.s32.totalorder %s116, %s130
      %p132 = scmp.eq.s32.totalorder %s22, 0
      %p133 = por %p131, %p132
      %s134 = ssub.s32 %s16, %s23
      %p135 = scmp.eq.s32.totalorder %s134, 0
      %s137 = sadd.s32 %s136, 1
      %s138 = scalar_select %p135, %s136, %s137
      %p141 = pneg %p135
      %p142 = scmp.eq.s32.totalorder %s16, 1
      %p143 = por %p141, %p142
      %p144 = scmp.ne.s32.totalorder %s136, %s139
      %p145 = scmp.eq.s32.totalorder %s16, 0
      %p146 = por %p144, %p145
      %p147 = scmp.ne.s32.totalorder %s136, %s139
      %p148 = scmp.eq.s32.totalorder %s21, 1
      %p149 = por %p147, %p148
      %p150 = scmp.ne.s32.totalorder %s139, %s140
      %p151 = scmp.eq.s32.totalorder %s21, 0
      %p152 = por %p150, %p151
      %p153 = scmp.ne.s32.totalorder %s139, %s140
      %p154 = scmp.eq.s32.totalorder %s22, 1
      %p155 = por %p153, %p154
      %p157 = scmp.ne.s32.totalorder %s140, %s156
      %p158 = scmp.eq.s32.totalorder %s22, 0
      %p159 = por %p157, %p158
      %p160 = scmp.le.s32.totalorder 1, %s16
      %p161 = scmp.lt.s32.totalorder %s16, 3
      %p162 = pnand %p160, %p161
      %p163 = pneg %p162
      // Predicated region
      $region9: #{tpu_custom_call.1} parent=5 // pred_check
        _
      $region10: #{tpu_custom_call.1} parent=5 // pred_check_branch
        %165 = sbr.rel (%p162) target = $region12
      $region11: #{tpu_custom_call.1} parent=5 // pred_region
        %s166 = ssub.s32 %s16, 1
        // Predicated region
        $region13: #{tpu_custom_call.1} parent=11 // pred_check
          %p167 = pneg %p63
        $region14: #{tpu_custom_call.1} parent=11 // pred_check_branch
          %169 = sbr.rel (%p167) target = $region16
        $region15: #{tpu_custom_call.1} parent=11 // pred_region
          %s171 = ssub.s32 1728, 1728
          %172 = vsyncadd [#allocation4], %s171
          %s173 = sshll.u32 [#allocation3], 4
          %s174 = int_to_ptr.vmem [resolvable:$true] %s173
          %179 = dma.hbm_to_vmem [thread:$0]  %s1, 1728, %s174, [#allocation4], 64, 64, 4
        $region16: #{tpu_custom_call.1} parent=11 // pred_fallthru
          _
        // Predicated region
        $region17: #{tpu_custom_call.1} parent=11 // pred_check
          %p180 = pneg %p84
        $region18: #{tpu_custom_call.1} parent=11 // pred_check_branch
          %182 = sbr.rel (%p180) target = $region20
        $region19: #{tpu_custom_call.1} parent=11 // pred_region
          _
        $region20: #{tpu_custom_call.1} parent=11 // pred_fallthru
          _
        // Predicated region
        $region21: #{tpu_custom_call.1} parent=11 // pred_check
          %p183 = pneg %p105
        $region22: #{tpu_custom_call.1} parent=11 // pred_check_branch
          %185 = sbr.rel (%p183) target = $region24
        $region23: #{tpu_custom_call.1} parent=11 // pred_region
          %s187 = ssub.s32 3456, 3456
          %188 = vsyncadd [#allocation7], %s187
          %s189 = sshll.u32 [#allocation6], 4
          %s190 = int_to_ptr.vmem [resolvable:$true] %s189
          %195 = dma.hbm_to_vmem [thread:$0]  %s3, 3456, %s190, [#allocation7], 64, 64, 4
        $region24: #{tpu_custom_call.1} parent=11 // pred_fallthru
          _
        // Predicated region
        $region25: #{tpu_custom_call.1} parent=11 // pred_check
          %p196 = pneg %p126
        $region26: #{tpu_custom_call.1} parent=11 // pred_check_branch
          %198 = sbr.rel (%p196) target = $region28
        $region27: #{tpu_custom_call.1} parent=11 // pred_region
          _
        $region28: #{tpu_custom_call.1} parent=11 // pred_fallthru
          _
      $region12: #{tpu_custom_call.1} parent=5 // pred_fallthru
        _
      %p199 = scmp.lt.s32.totalorder %s16, 2
      // Predicated region
      $region29: #{tpu_custom_call.1} parent=5 // pred_check
        %p200 = pneg %p199
      $region30: #{tpu_custom_call.1} parent=5 // pred_check_branch
        %202 = sbr.rel (%p200) target = $region32
      $region31: #{tpu_custom_call.1} parent=5 // pred_region
        // Predicated region
        $region33: #{tpu_custom_call.1} parent=31 // pred_check
          %p203 = pneg %p36
        $region34: #{tpu_custom_call.1} parent=31 // pred_check_branch
          %205 = sbr.rel (%p203) target = $region36
        $region35: #{tpu_custom_call.1} parent=31 // pred_region
          %p206 = scmp.lt.s32.totalorder %s16, 1
          %s207 = scalar_select %p206, %s16, 1
          %s208 = smul.addr %s207, 3
          %s209 = smul.addr %s208, 4
          %s210 = scalar_lea.vmem %s0, %s209
        $region36: #{tpu_custom_call.1} parent=31 // pred_fallthru
          _
      $region32: #{tpu_custom_call.1} parent=5 // pred_fallthru
        _
      %p211 = scmp.le.s32.totalorder 1, %s16
      %p212 = scmp.lt.s32.totalorder %s16, 3
      %p213 = pnand %p211, %p212
      %p214 = pneg %p213
      // Predicated region
      $region37: #{tpu_custom_call.1} parent=5 // pred_check
        _
      $region38: #{tpu_custom_call.1} parent=5 // pred_check_branch
        %216 = sbr.rel (%p213) target = $region40
      $region39: #{tpu_custom_call.1} parent=5 // pred_region
        %s217 = ssub.s32 %s16, 1
        // Predicated region
        $region41: #{tpu_custom_call.1} parent=39 // pred_check
          %p218 = pneg %p63
        $region42: #{tpu_custom_call.1} parent=39 // pred_check_branch
          %220 = sbr.rel (%p218) target = $region44
        $region43: #{tpu_custom_call.1} parent=39 // pred_region
          %221 = dma.done [#allocation4], 1728
        $region44: #{tpu_custom_call.1} parent=39 // pred_fallthru
          _
        // Predicated region
        $region45: #{tpu_custom_call.1} parent=39 // pred_check
          %p222 = pneg %p105
        $region46: #{tpu_custom_call.1} parent=39 // pred_check_branch
          %224 = sbr.rel (%p222) target = $region48
        $region47: #{tpu_custom_call.1} parent=39 // pred_region
          %225 = dma.done [#allocation7], 3456
        $region48: #{tpu_custom_call.1} parent=39 // pred_fallthru
          _
        %p226 = scmp.lt.s32.totalorder %s21, 1
        %s227 = scalar_select %p226, %s21, 1
        %s228 = smul.addr %s227, 3
        %s229 = smul.addr %s228, 4
        %s230 = scalar_lea.vmem %s0, %s229
        %p231 = pneg %p42
        %p232 = pneg %p39
        %p233 = pneg %p63
        %p234 = pneg %p60
        %p235 = pneg %p84
        %p236 = pneg %p81
        %p237 = pneg %p105
        %p238 = pneg %p102
        %p239 = pneg %p126
        %p240 = pneg %p123
        %p241 = pneg %p152
        %p242 = pneg %p149
        %s243 = sand.u32 %s139, 1
        %s244 = scalar_lea.sflag [#allocation5], %s243
        %s245 = sand.u32 %s139, 1
        %s246 = smul.addr %s245, 16
        %s247 = scalar_lea.vmem [#allocation8], %s246
        %p248 = scmp.lt.s32.totalorder %s21, 1
        %s249 = scalar_select %p248, %s21, 1
        %s250 = smul.addr %s249, 3
        %s251 = smul.addr %s250, 4
        %s252 = scalar_lea.vmem %s0, %s251
        %v254 = vld [vmem:[%s252] sm:$0xf]
        %v255 = vld [vmem:[%s252 + $0x4] sm:$0xf]
        %v256 = vld [vmem:[#allocation3] sm:$0xf]
        %v257 = vld [vmem:[#allocation3 + $0x4] sm:$0xf]
        %v258 = vld [vmem:[#allocation3 + $0x8] sm:$0xf]
        %v259 = vld [vmem:[#allocation3 + $0xc] sm:$0xf]
        %v260 = vld [vmem:[#allocation3 + $0x10] sm:$0xf]
        %v261 = vld [vmem:[#allocation3 + $0x14] sm:$0xf]
        %v262 = vld [vmem:[#allocation3 + $0x18] sm:$0xf]
        %v263 = vld [vmem:[#allocation3 + $0x1c] sm:$0xf]
        %v264 = vld [vmem:[#allocation3 + $0x20] sm:$0xf]
        %v265 = vld [vmem:[%s252 + $0x8] sm:$0x1]
        %s266 = scalar_lea.vmem [#allocation3], 36
        %v267 = vld [vmem:[%s266] sm:$0xf]
        %v268 = vld [vmem:[%s266 + $0x4] sm:$0xf]
        %v269 = vld [vmem:[%s266 + $0x8] sm:$0xf]
        %v270 = vld [vmem:[%s266 + $0xc] sm:$0xf]
        %v271 = vld [vmem:[%s266 + $0x10] sm:$0xf]
        %v272 = vld [vmem:[%s266 + $0x14] sm:$0xf]
        %v273 = vld [vmem:[%s266 + $0x18] sm:$0xf]
        %v274 = vld [vmem:[%s266 + $0x1c] sm:$0xf]
        %v275 = vld [vmem:[%s266 + $0x20] sm:$0xf]
        %v279 = vunpack.c.l.b16 %v254
        %v280 = vunpack.c.l.b16 %v255
        %v281 = vunpack.c.l.b16 %v265
        %v282 = vpack.c.b16 %v280, %v279
        %v283 = vpack.c.b16 %v281, %v281
        %vm284 = vsmask.f32 7424
        %v286 = vshrl.u32 %v282, 16
        %v288 = vshll.u32 %v282, 16
        %v290 = vrot.slane %v288, 1
        %v291 = vor.u32 %v286, %v290
        %v293 = vshll.u32 %v283, 16
        %v295 = vrot.slane %v293, 1
        %v296 = vsel %vm284, %v291, %v295
        %v306 = vunpack.c.l.b16 %v267
        %v307 = vunpack.c.l.b16 %v268
        %v308 = vunpack.c.l.b16 %v269
        %v309 = vunpack.c.l.b16 %v270
        %v310 = vunpack.c.l.b16 %v271
        %v311 = vunpack.c.l.b16 %v272
        %v312 = vunpack.c.l.b16 %v273
        %v313 = vunpack.c.l.b16 %v274
        %v314 = vunpack.c.l.b16 %v275
        %v315 = vpack.c.b16 %v307, %v306
        %v316 = vpack.c.b16 %v309, %v308
        %v317 = vpack.c.b16 %v311, %v310
        %v318 = vpack.c.b16 %v313, %v312
        %v319 = vpack.c.b16 %v314, %v314
        %vm324 = vcmask 588800
        %v326 = vsel %vm324, %v296, 0
        %vm328 = vcmask 1043456
        %v330 = vsel %vm328, %v319, 0
        %332 = vmatprep.subr.bf16.mxu0 0
        %333 = vmatpush1.bf16.msra.mxu0 %v315
        %334 = vmatprep.subr.bf16.mxu0 0
        %335 = vmatpush1.bf16.msra.mxu0 %v316
        %336 = vmatprep.subr.bf16.mxu0 0
        %337 = vmatpush1.bf16.msra.mxu0 %v317
        %338 = vmatprep.subr.bf16.mxu0 0
        %339 = vmatpush1.bf16.msra.mxu0 %v318
        %340 = vmatprep.subr.bf16.mxu0 0
        %341 = vmatpush1.bf16.msra.mxu0 %v330
        %342 = vmatprep.subr.bf16.mxu0 0
        %343 = vmatpush1.bf16.msra.mxu0 0
        %344 = vmatprep.subr.bf16.mxu0 0
        %345 = vmatpush1.bf16.msra.mxu0 0
        %346 = vmatprep.subr.bf16.mxu0 0
        %347 = vmatpush1.bf16.msra.mxu0 0
        %348 = vmatprep.subr.bf16.mxu0 0
        %349 = vmatpush1.bf16.msra.mxu0 0
        %350 = vmatprep.subr.bf16.mxu0 0
        %351 = vmatpush1.bf16.msra.mxu0 0
        %352 = vmatprep.subr.bf16.mxu0 0
        %353 = vmatpush1.bf16.msra.mxu0 0
        %354 = vmatprep.subr.bf16.mxu0 0
        %355 = vmatpush1.bf16.msra.mxu0 0
        %356 = vmatprep.subr.bf16.mxu0 0
        %357 = vmatpush1.bf16.msra.mxu0 0
        %358 = vmatprep.subr.bf16.mxu0 0
        %359 = vmatpush1.bf16.msra.mxu0 0
        %360 = vmatprep.subr.bf16.mxu0 0
        %361 = vmatpush1.bf16.msra.mxu0 0
        %362 = vmatprep.subr.bf16.mxu0 0
        %363 = vmatpush1.bf16.msra.mxu0 0
        %364 = vmatprep.mubr.bf16.mxu0 0
        %365 = vmatmul.mubr.bf16.gmra.mrb[0].mxu0 %v326
        %v366 = vpop.f32.mrb[0].mxu0
        %v367 = vadd.f32 0.0, %v366
        %v368 = vpop.f32.mrb[0].mxu0
        %v369 = vpop.f32.mrb[0].mxu0
        %v370 = vadd.f32 0.0, %v369
        %v371 = vpop.f32.mrb[0].mxu0
        %372 = vdwg.mxu0
        %v382 = vunpack.c.l.b16 %v256
        %v383 = vunpack.c.l.b16 %v257
        %v384 = vunpack.c.l.b16 %v258
        %v385 = vunpack.c.l.b16 %v259
        %v386 = vunpack.c.l.b16 %v260
        %v387 = vunpack.c.l.b16 %v261
        %v388 = vunpack.c.l.b16 %v262
        %v389 = vunpack.c.l.b16 %v263
        %v390 = vunpack.c.l.b16 %v264
        %v391 = vpack.c.b16 %v383, %v382
        %v392 = vpack.c.b16 %v385, %v384
        %v393 = vpack.c.b16 %v387, %v386
        %v394 = vpack.c.b16 %v389, %v388
        %v395 = vpack.c.b16 %v390, %v390
        %v400 = vsel %vm324, %v282, 0
        %v403 = vsel %vm328, %v395, 0
        %405 = vmatprep.subr.bf16.mxu0 0
        %406 = vmatpush1.bf16.msra.mxu0 %v391
        %407 = vmatprep.subr.bf16.mxu0 0
        %408 = vmatpush1.bf16.msra.mxu0 %v392
        %409 = vmatprep.subr.bf16.mxu0 0
        %410 = vmatpush1.bf16.msra.mxu0 %v393
        %411 = vmatprep.subr.bf16.mxu0 0
        %412 = vmatpush1.bf16.msra.mxu0 %v394
        %413 = vmatprep.subr.bf16.mxu0 0
        %414 = vmatpush1.bf16.msra.mxu0 %v403
        %415 = vmatprep.subr.bf16.mxu0 0
        %416 = vmatpush1.bf16.msra.mxu0 0
        %417 = vmatprep.subr.bf16.mxu0 0
        %418 = vmatpush1.bf16.msra.mxu0 0
        %419 = vmatprep.subr.bf16.mxu0 0
        %420 = vmatpush1.bf16.msra.mxu0 0
        %421 = vmatprep.subr.bf16.mxu0 0
        %422 = vmatpush1.bf16.msra.mxu0 0
        %423 = vmatprep.subr.bf16.mxu0 0
        %424 = vmatpush1.bf16.msra.mxu0 0
        %425 = vmatprep.subr.bf16.mxu0 0
        %426 = vmatpush1.bf16.msra.mxu0 0
        %427 = vmatprep.subr.bf16.mxu0 0
        %428 = vmatpush1.bf16.msra.mxu0 0
        %429 = vmatprep.subr.bf16.mxu0 0
        %430 = vmatpush1.bf16.msra.mxu0 0
        %431 = vmatprep.subr.bf16.mxu0 0
        %432 = vmatpush1.bf16.msra.mxu0 0
        %433 = vmatprep.subr.bf16.mxu0 0
        %434 = vmatpush1.bf16.msra.mxu0 0
        %435 = vmatprep.subr.bf16.mxu0 0
        %436 = vmatpush1.bf16.msra.mxu0 0
        %437 = vmatprep.mubr.bf16.mxu0 0
        %438 = vmatmul.mubr.bf16.gmra.mrb[0].mxu0 %v400
        %v439 = vpop.f32.mrb[0].mxu0
        %v440 = vadd.f32 %v367, %v439
        %v441 = vpop.f32.mrb[0].mxu0
        %v442 = vpop.f32.mrb[0].mxu0
        %v443 = vadd.f32 %v370, %v442
        %v444 = vpop.f32.mrb[0].mxu0
        %445 = vdwg.mxu0
        %v446 = vld [vmem:[%s252] sm:$0xe]
        %s447 = scalar_lea.vmem [#allocation3], 72
        %v448 = vld [vmem:[%s447] sm:$0xf]
        %v449 = vld [vmem:[%s447 + $0x4] sm:$0xf]
        %v450 = vld [vmem:[%s447 + $0x8] sm:$0xf]
        %v451 = vld [vmem:[%s447 + $0xc] sm:$0xf]
        %v452 = vld [vmem:[%s447 + $0x10] sm:$0xf]
        %v453 = vld [vmem:[%s447 + $0x14] sm:$0xf]
        %v454 = vld [vmem:[%s447 + $0x18] sm:$0xf]
        %v455 = vld [vmem:[%s447 + $0x1c] sm:$0xf]
        %v456 = vld [vmem:[%s447 + $0x20] sm:$0xf]
        %v458 = vunpack.c.l.b16 %v446
        %v459 = vpack.c.b16 %v280, %v458
        %vm460 = vcmask 1046528
        %v461 = vrot.slane %v459, 1
        %v462 = vrot.slane %v283, 1
        %v463 = vsel %vm460, %v461, %v462
        %v473 = vunpack.c.l.b16 %v448
        %v474 = vunpack.c.l.b16 %v449
        %v475 = vunpack.c.l.b16 %v450
        %v476 = vunpack.c.l.b16 %v451
        %v477 = vunpack.c.l.b16 %v452
        %v478 = vunpack.c.l.b16 %v453
        %v479 = vunpack.c.l.b16 %v454
        %v480 = vunpack.c.l.b16 %v455
        %v481 = vunpack.c.l.b16 %v456
        %v482 = vpack.c.b16 %v474, %v473
        %v483 = vpack.c.b16 %v476, %v475
        %v484 = vpack.c.b16 %v478, %v477
        %v485 = vpack.c.b16 %v480, %v479
        %v486 = vpack.c.b16 %v481, %v481
        %v492 = vsel %vm324, %v463, 0
        %v495 = vsel %vm328, %v486, 0
        %497 = vmatprep.subr.bf16.mxu0 0
        %498 = vmatpush1.bf16.msra.mxu0 %v482
        %499 = vmatprep.subr.bf16.mxu0 0
        %500 = vmatpush1.bf16.msra.mxu0 %v483
        %501 = vmatprep.subr.bf16.mxu0 0
        %502 = vmatpush1.bf16.msra.mxu0 %v484
        %503 = vmatprep.subr.bf16.mxu0 0
        %504 = vmatpush1.bf16.msra.mxu0 %v485
        %505 = vmatprep.subr.bf16.mxu0 0
        %506 = vmatpush1.bf16.msra.mxu0 %v495
        %507 = vmatprep.subr.bf16.mxu0 0
        %508 = vmatpush1.bf16.msra.mxu0 0
        %509 = vmatprep.subr.bf16.mxu0 0
        %510 = vmatpush1.bf16.msra.mxu0 0
        %511 = vmatprep.subr.bf16.mxu0 0
        %512 = vmatpush1.bf16.msra.mxu0 0
        %513 = vmatprep.subr.bf16.mxu0 0
        %514 = vmatpush1.bf16.msra.mxu0 0
        %515 = vmatprep.subr.bf16.mxu0 0
        %516 = vmatpush1.bf16.msra.mxu0 0
        %517 = vmatprep.subr.bf16.mxu0 0
        %518 = vmatpush1.bf16.msra.mxu0 0
        %519 = vmatprep.subr.bf16.mxu0 0
        %520 = vmatpush1.bf16.msra.mxu0 0
        %521 = vmatprep.subr.bf16.mxu0 0
        %522 = vmatpush1.bf16.msra.mxu0 0
        %523 = vmatprep.subr.bf16.mxu0 0
        %524 = vmatpush1.bf16.msra.mxu0 0
        %525 = vmatprep.subr.bf16.mxu0 0
        %526 = vmatpush1.bf16.msra.mxu0 0
        %527 = vmatprep.subr.bf16.mxu0 0
        %528 = vmatpush1.bf16.msra.mxu0 0
        %529 = vmatprep.mubr.bf16.mxu0 0
        %530 = vmatmul.mubr.bf16.gmra.mrb[0].mxu0 %v492
        %v531 = vpop.f32.mrb[0].mxu0
        %v532 = vadd.f32 0.0, %v531
        %v533 = vpop.f32.mrb[0].mxu0
        %v534 = vpop.f32.mrb[0].mxu0
        %v535 = vadd.f32 0.0, %v534
        %v536 = vpop.f32.mrb[0].mxu0
        %537 = vdwg.mxu0
        %v538 = vadd.f32 %v440, %v532
        %v539 = vadd.f32 %v443, %v535
        %v540 = vld [vmem:[%s2] sm:$0x1]
        %v542 = vlaneseq
        %v543 = vshrl.u32 %v542, 7
        %v544 = vsub.s32 0, %v543
        %v545 = vrot.slane %v540, %v544
        %v547 = vadd.f32 %v538, %v545
        %v548 = vadd.f32 %v539, %v545
        %v549 = vmax.f32 %v547, 0.0
        %v550 = vmax.f32 %v548, 0.0
        %v551 = vlaneseq
        %vm552 = vcmp.ge.s32.totalorder %v551, 0
        %vm553 = vcmp.lt.s32.totalorder %v551, 144
        %vm554 = vmand %vm552, %vm553
        %555 = vst.msk [vmem:[#allocation2] ss:$8 sm:$0x3] %vm554, 0.0
        %556 = vst.msk [vmem:[#allocation2] ss:$8 sm:$0x0] %vm554, 0.0
        %s557 = scalar_lea.vmem [#allocation2], 33
        %558 = vst.msk [vmem:[%s557] ss:$8 sm:$0x3] %vm554, 0.0
        %559 = vst.msk [vmem:[%s557] ss:$8 sm:$0x0] %vm554, 0.0
        %vm560 = vcmask 64512
        %561 = vst.msk [vmem:[#allocation2] sm:$0xff] %vm560, 0.0
        %562 = vst.msk [vmem:[#allocation2 + $0x10] sm:$0xff] %vm560, 0.0
        %vm563 = vcmask 58368
        %564 = vst.msk [vmem:[#allocation2 + $0x20] sm:$0x3] %vm563, 0.0
        %vm565 = vcmask 130112
        %566 = vst.msk [vmem:[#allocation2 + $0x8] sm:$0xff] %vm565, 0.0
        %567 = vst.msk [vmem:[#allocation2 + $0x18] sm:$0xff] %vm565, 0.0
        %vm568 = vcmask 123968
        %569 = vst.msk [vmem:[#allocation2 + $0x28] sm:$0x3] %vm568, 0.0
        %vm572 = vcmask 1040384
        %v573 = vrot.slane %v549, 7
        %v574 = vrot.slane %v550, 7
        %v575 = vsel %vm572, %v573, %v574
        %576 = vrot.lane.b32.xlu0 %v573, 8
        %v577 = vpop.permute.xlu0 %576
        %578 = vrot.lane.b32.xlu0 %v575, 8
        %v579 = vpop.permute.xlu0 %578
        %580 = vrot.lane.b32.xlu0 %v574, 8
        %v581 = vpop.permute.xlu0 %580
        %vm585 = vcmask 1047617
        %586 = vst.msk [vmem:[#allocation2] sm:$0xfe] %vm585, %v577
        %vm587 = vcmask 64513
        %588 = vst.msk [vmem:[#allocation2 + $0x8] sm:$0xfe] %vm587, %v577
        %vm589 = vcmask 1047616
        %590 = vst.msk [vmem:[#allocation2 + $0x10] sm:$0xff] %vm589, %v579
        %591 = vst.msk [vmem:[#allocation2 + $0x18] sm:$0xff] %vm560, %v579
        %vm592 = vcmask 1040448
        %593 = vst.msk [vmem:[#allocation2 + $0x20] sm:$0x1] %vm592, %v581
        %vm594 = vcmask 57344
        %595 = vst.msk [vmem:[#allocation2 + $0x28] sm:$0x1] %vm594, %v581
        %v596 = vld [vmem:[#allocation2] sm:$0xff]
        %v597 = vld [vmem:[#allocation2 + $0x8] sm:$0xff]
        %v598 = vld [vmem:[#allocation2 + $0x10] sm:$0xff]
        %v599 = vld [vmem:[#allocation2 + $0x18] sm:$0xff]
        %v600 = vpack.c.bf16 %v598, %v596
        %v601 = vpack.c.bf16 %v599, %v597
        %v602 = vld [vmem:[#allocation6] sm:$0xf]
        %v603 = vld [vmem:[#allocation6 + $0x4] sm:$0xf]
        %v604 = vld [vmem:[#allocation6 + $0x8] sm:$0xf]
        %v605 = vld [vmem:[#allocation6 + $0xc] sm:$0xf]
        %v606 = vld [vmem:[#allocation6 + $0x10] sm:$0xf]
        %v607 = vld [vmem:[#allocation6 + $0x14] sm:$0xf]
        %v608 = vld [vmem:[#allocation6 + $0x18] sm:$0xf]
        %v609 = vld [vmem:[#allocation6 + $0x1c] sm:$0xf]
        %v610 = vld [vmem:[#allocation6 + $0x20] sm:$0xf]
        %v611 = vld [vmem:[#allocation6 + $0x24] sm:$0xf]
        %v612 = vld [vmem:[#allocation6 + $0x28] sm:$0xf]
        %v613 = vld [vmem:[#allocation6 + $0x2c] sm:$0xf]
        %v614 = vld [vmem:[#allocation6 + $0x30] sm:$0xf]
        %v615 = vld [vmem:[#allocation6 + $0x34] sm:$0xf]
        %v616 = vld [vmem:[#allocation6 + $0x38] sm:$0xf]
        %v617 = vld [vmem:[#allocation6 + $0x3c] sm:$0xf]
        %v618 = vld [vmem:[#allocation6 + $0x40] sm:$0xf]
        %v619 = vld [vmem:[#allocation6 + $0x44] sm:$0xf]
        %v620 = vld [vmem:[#allocation2] sm:$0xfe]
        %v621 = vld [vmem:[#allocation2 + $0x8] sm:$0xfe]
        %v622 = vld [vmem:[#allocation2 + $0x20] sm:$0x1]
        %v623 = vld [vmem:[#allocation2 + $0x28] sm:$0x1]
        %v624 = vpack.c.bf16 %v598, %v620
        %v625 = vpack.c.bf16 %v599, %v621
        %v626 = vpack.c.bf16 %v622, %v622
        %v627 = vpack.c.bf16 %v623, %v623
        %s628 = scalar_lea.vmem [#allocation6], 72
        %v629 = vld [vmem:[%s628] sm:$0xf]
        %v630 = vld [vmem:[%s628 + $0x4] sm:$0xf]
        %v631 = vld [vmem:[%s628 + $0x8] sm:$0xf]
        %v632 = vld [vmem:[%s628 + $0xc] sm:$0xf]
        %v633 = vld [vmem:[%s628 + $0x10] sm:$0xf]
        %v634 = vld [vmem:[%s628 + $0x14] sm:$0xf]
        %v635 = vld [vmem:[%s628 + $0x18] sm:$0xf]
        %v636 = vld [vmem:[%s628 + $0x1c] sm:$0xf]
        %v637 = vld [vmem:[%s628 + $0x20] sm:$0xf]
        %v638 = vld [vmem:[%s628 + $0x24] sm:$0xf]
        %v639 = vld [vmem:[%s628 + $0x28] sm:$0xf]
        %v640 = vld [vmem:[%s628 + $0x2c] sm:$0xf]
        %v641 = vld [vmem:[%s628 + $0x30] sm:$0xf]
        %v642 = vld [vmem:[%s628 + $0x34] sm:$0xf]
        %v643 = vld [vmem:[%s628 + $0x38] sm:$0xf]
        %v644 = vld [vmem:[%s628 + $0x3c] sm:$0xf]
        %v645 = vld [vmem:[%s628 + $0x40] sm:$0xf]
        %v646 = vld [vmem:[%s628 + $0x44] sm:$0xf]
        %v648 = vshrl.u32 %v624, 16
        %v650 = vshll.u32 %v624, 16
        %v652 = vrot.slane %v650, 1
        %v653 = vor.u32 %v648, %v652
        %v655 = vshll.u32 %v626, 16
        %v657 = vrot.slane %v655, 1
        %v658 = vsel %vm284, %v653, %v657
        %v660 = vshrl.u32 %v625, 16
        %v662 = vshll.u32 %v625, 16
        %v664 = vrot.slane %v662, 1
        %v665 = vor.u32 %v660, %v664
        %v667 = vshll.u32 %v627, 16
        %v669 = vrot.slane %v667, 1
        %v670 = vsel %vm284, %v665, %v669
        %v690 = vunpack.c.l.b16 %v629
        %v691 = vunpack.c.l.b16 %v630
        %v692 = vunpack.c.l.b16 %v631
        %v693 = vunpack.c.l.b16 %v632
        %v694 = vunpack.c.l.b16 %v633
        %v695 = vunpack.c.l.b16 %v634
        %v696 = vunpack.c.l.b16 %v635
        %v697 = vunpack.c.l.b16 %v636
        %v698 = vunpack.c.l.b16 %v637
        %v699 = vunpack.c.l.b16 %v638
        %v700 = vunpack.c.l.b16 %v639
        %v701 = vunpack.c.l.b16 %v640
        %v702 = vunpack.c.l.b16 %v641
        %v703 = vunpack.c.l.b16 %v642
        %v704 = vunpack.c.l.b16 %v643
        %v705 = vunpack.c.l.b16 %v644
        %v706 = vunpack.c.l.b16 %v645
        %v707 = vunpack.c.l.b16 %v646
        %v708 = vpack.c.b16 %v691, %v690
        %v709 = vpack.c.b16 %v693, %v692
        %v710 = vpack.c.b16 %v695, %v694
        %v711 = vpack.c.b16 %v697, %v696
        %v712 = vpack.c.b16 %v699, %v698
        %v713 = vpack.c.b16 %v701, %v700
        %v714 = vpack.c.b16 %v703, %v702
        %v715 = vpack.c.b16 %v705, %v704
        %v716 = vpack.c.b16 %v707, %v706
        %vm726 = vcmask 130048
        %v728 = vsel %vm726, %v670, 0
        %730 = vmatprep.subr.bf16.mxu0 0
        %731 = vmatpush1.bf16.msra.mxu0 %v708
        %732 = vmatprep.subr.bf16.mxu0 0
        %733 = vmatpush1.bf16.msra.mxu0 %v709
        %734 = vmatprep.subr.bf16.mxu0 0
        %735 = vmatpush1.bf16.msra.mxu0 %v710
        %736 = vmatprep.subr.bf16.mxu0 0
        %737 = vmatpush1.bf16.msra.mxu0 %v711
        %738 = vmatprep.subr.bf16.mxu0 0
        %739 = vmatpush1.bf16.msra.mxu0 %v712
        %740 = vmatprep.subr.bf16.mxu0 0
        %741 = vmatpush1.bf16.msra.mxu0 %v713
        %742 = vmatprep.subr.bf16.mxu0 0
        %743 = vmatpush1.bf16.msra.mxu0 %v714
        %744 = vmatprep.subr.bf16.mxu0 0
        %745 = vmatpush1.bf16.msra.mxu0 %v715
        %746 = vmatprep.subr.bf16.mxu0 0
        %747 = vmatpush1.bf16.msra.mxu0 %v716
        %748 = vmatprep.subr.bf16.mxu0 0
        %749 = vmatpush1.bf16.msra.mxu0 0
        %750 = vmatprep.subr.bf16.mxu0 0
        %751 = vmatpush1.bf16.msra.mxu0 0
        %752 = vmatprep.subr.bf16.mxu0 0
        %753 = vmatpush1.bf16.msra.mxu0 0
        %754 = vmatprep.subr.bf16.mxu0 0
        %755 = vmatpush1.bf16.msra.mxu0 0
        %756 = vmatprep.subr.bf16.mxu0 0
        %757 = vmatpush1.bf16.msra.mxu0 0
        %758 = vmatprep.subr.bf16.mxu0 0
        %759 = vmatpush1.bf16.msra.mxu0 0
        %760 = vmatprep.subr.bf16.mxu0 0
        %761 = vmatpush1.bf16.msra.mxu0 0
        %762 = vmatprep.mubr.bf16.mxu0 %v728
        %763 = vmatmul.mubr.bf16.gmra.mrb[0].mxu0 %v658
        %v764 = vpop.f32.mrb[0].mxu0
        %v765 = vadd.f32 0.0, %v764
        %v766 = vpop.f32.mrb[0].mxu0
        %v767 = vpop.f32.mrb[0].mxu0
        %v768 = vadd.f32 0.0, %v767
        %v769 = vpop.f32.mrb[0].mxu0
        %770 = vdwg.mxu0
        %v789 = vunpack.c.l.b16 %v602
        %v790 = vunpack.c.l.b16 %v603
        %v791 = vunpack.c.l.b16 %v604
        %v792 = vunpack.c.l.b16 %v605
        %v793 = vunpack.c.l.b16 %v606
        %v794 = vunpack.c.l.b16 %v607
        %v795 = vunpack.c.l.b16 %v608
        %v796 = vunpack.c.l.b16 %v609
        %v797 = vunpack.c.l.b16 %v610
        %v798 = vunpack.c.l.b16 %v611
        %v799 = vunpack.c.l.b16 %v612
        %v800 = vunpack.c.l.b16 %v613
        %v801 = vunpack.c.l.b16 %v614
        %v802 = vunpack.c.l.b16 %v615
        %v803 = vunpack.c.l.b16 %v616
        %v804 = vunpack.c.l.b16 %v617
        %v805 = vunpack.c.l.b16 %v618
        %v806 = vunpack.c.l.b16 %v619
        %v807 = vpack.c.b16 %v790, %v789
        %v808 = vpack.c.b16 %v792, %v791
        %v809 = vpack.c.b16 %v794, %v793
        %v810 = vpack.c.b16 %v796, %v795
        %v811 = vpack.c.b16 %v798, %v797
        %v812 = vpack.c.b16 %v800, %v799
        %v813 = vpack.c.b16 %v802, %v801
        %v814 = vpack.c.b16 %v804, %v803
        %v815 = vpack.c.b16 %v806, %v805
        %v826 = vsel %vm726, %v601, 0
        %828 = vmatprep.subr.bf16.mxu0 0
        %829 = vmatpush1.bf16.msra.mxu0 %v807
        %830 = vmatprep.subr.bf16.mxu0 0
        %831 = vmatpush1.bf16.msra.mxu0 %v808
        %832 = vmatprep.subr.bf16.mxu0 0
        %833 = vmatpush1.bf16.msra.mxu0 %v809
        %834 = vmatprep.subr.bf16.mxu0 0
        %835 = vmatpush1.bf16.msra.mxu0 %v810
        %836 = vmatprep.subr.bf16.mxu0 0
        %837 = vmatpush1.bf16.msra.mxu0 %v811
        %838 = vmatprep.subr.bf16.mxu0 0
        %839 = vmatpush1.bf16.msra.mxu0 %v812
        %840 = vmatprep.subr.bf16.mxu0 0
        %841 = vmatpush1.bf16.msra.mxu0 %v813
        %842 = vmatprep.subr.bf16.mxu0 0
        %843 = vmatpush1.bf16.msra.mxu0 %v814
        %844 = vmatprep.subr.bf16.mxu0 0
        %845 = vmatpush1.bf16.msra.mxu0 %v815
        %846 = vmatprep.subr.bf16.mxu0 0
        %847 = vmatpush1.bf16.msra.mxu0 0
        %848 = vmatprep.subr.bf16.mxu0 0
        %849 = vmatpush1.bf16.msra.mxu0 0
        %850 = vmatprep.subr.bf16.mxu0 0
        %851 = vmatpush1.bf16.msra.mxu0 0
        %852 = vmatprep.subr.bf16.mxu0 0
        %853 = vmatpush1.bf16.msra.mxu0 0
        %854 = vmatprep.subr.bf16.mxu0 0
        %855 = vmatpush1.bf16.msra.mxu0 0
        %856 = vmatprep.subr.bf16.mxu0 0
        %857 = vmatpush1.bf16.msra.mxu0 0
        %858 = vmatprep.subr.bf16.mxu0 0
        %859 = vmatpush1.bf16.msra.mxu0 0
        %860 = vmatprep.mubr.bf16.mxu0 %v826
        %861 = vmatmul.mubr.bf16.gmra.mrb[0].mxu0 %v600
        %v862 = vpop.f32.mrb[0].mxu0
        %v863 = vadd.f32 %v765, %v862
        %v864 = vpop.f32.mrb[0].mxu0
        %v865 = vpop.f32.mrb[0].mxu0
        %v866 = vadd.f32 %v768, %v865
        %v867 = vpop.f32.mrb[0].mxu0
        %868 = vdwg.mxu0
        %v869 = vld [vmem:[#allocation2] sm:$0xfc]
        %v870 = vld [vmem:[#allocation2 + $0x8] sm:$0xfc]
        %v871 = vld [vmem:[#allocation2 + $0x20] sm:$0x3]
        %v872 = vld [vmem:[#allocation2 + $0x28] sm:$0x3]
        %v873 = vpack.c.bf16 %v598, %v869
        %v874 = vpack.c.bf16 %v599, %v870
        %v875 = vpack.c.bf16 %v871, %v871
        %v876 = vpack.c.bf16 %v872, %v872
        %s877 = scalar_lea.vmem [#allocation6], 144
        %v878 = vld [vmem:[%s877] sm:$0xf]
        %v879 = vld [vmem:[%s877 + $0x4] sm:$0xf]
        %v880 = vld [vmem:[%s877 + $0x8] sm:$0xf]
        %v881 = vld [vmem:[%s877 + $0xc] sm:$0xf]
        %v882 = vld [vmem:[%s877 + $0x10] sm:$0xf]
        %v883 = vld [vmem:[%s877 + $0x14] sm:$0xf]
        %v884 = vld [vmem:[%s877 + $0x18] sm:$0xf]
        %v885 = vld [vmem:[%s877 + $0x1c] sm:$0xf]
        %v886 = vld [vmem:[%s877 + $0x20] sm:$0xf]
        %v887 = vld [vmem:[%s877 + $0x24] sm:$0xf]
        %v888 = vld [vmem:[%s877 + $0x28] sm:$0xf]
        %v889 = vld [vmem:[%s877 + $0x2c] sm:$0xf]
        %v890 = vld [vmem:[%s877 + $0x30] sm:$0xf]
        %v891 = vld [vmem:[%s877 + $0x34] sm:$0xf]
        %v892 = vld [vmem:[%s877 + $0x38] sm:$0xf]
        %v893 = vld [vmem:[%s877 + $0x3c] sm:$0xf]
        %v894 = vld [vmem:[%s877 + $0x40] sm:$0xf]
        %v895 = vld [vmem:[%s877 + $0x44] sm:$0xf]
        %v900 = vrot.slane %v873, 1
        %v901 = vrot.slane %v875, 1
        %v902 = vsel %vm460, %v900, %v901
        %v903 = vrot.slane %v874, 1
        %v904 = vrot.slane %v876, 1
        %v905 = vsel %vm460, %v903, %v904
        %v925 = vunpack.c.l.b16 %v878
        %v926 = vunpack.c.l.b16 %v879
        %v927 = vunpack.c.l.b16 %v880
        %v928 = vunpack.c.l.b16 %v881
        %v929 = vunpack.c.l.b16 %v882
        %v930 = vunpack.c.l.b16 %v883
        %v931 = vunpack.c.l.b16 %v884
        %v932 = vunpack.c.l.b16 %v885
        %v933 = vunpack.c.l.b16 %v886
        %v934 = vunpack.c.l.b16 %v887
        %v935 = vunpack.c.l.b16 %v888
        %v936 = vunpack.c.l.b16 %v889
        %v937 = vunpack.c.l.b16 %v890
        %v938 = vunpack.c.l.b16 %v891
        %v939 = vunpack.c.l.b16 %v892
        %v940 = vunpack.c.l.b16 %v893
        %v941 = vunpack.c.l.b16 %v894
        %v942 = vunpack.c.l.b16 %v895
        %v943 = vpack.c.b16 %v926, %v925
        %v944 = vpack.c.b16 %v928, %v927
        %v945 = vpack.c.b16 %v930, %v929
        %v946 = vpack.c.b16 %v932, %v931
        %v947 = vpack.c.b16 %v934, %v933
        %v948 = vpack.c.b16 %v936, %v935
        %v949 = vpack.c.b16 %v938, %v937
        %v950 = vpack.c.b16 %v940, %v939
        %v951 = vpack.c.b16 %v942, %v941
        %v962 = vsel %vm726, %v905, 0
        %964 = vmatprep.subr.bf16.mxu0 0
        %965 = vmatpush1.bf16.msra.mxu0 %v943
        %966 = vmatprep.subr.bf16.mxu0 0
        %967 = vmatpush1.bf16.msra.mxu0 %v944
        %968 = vmatprep.subr.bf16.mxu0 0
        %969 = vmatpush1.bf16.msra.mxu0 %v945
        %970 = vmatprep.subr.bf16.mxu0 0
        %971 = vmatpush1.bf16.msra.mxu0 %v946
        %972 = vmatprep.subr.bf16.mxu0 0
        %973 = vmatpush1.bf16.msra.mxu0 %v947
        %974 = vmatprep.subr.bf16.mxu0 0
        %975 = vmatpush1.bf16.msra.mxu0 %v948
        %976 = vmatprep.subr.bf16.mxu0 0
        %977 = vmatpush1.bf16.msra.mxu0 %v949
        %978 = vmatprep.subr.bf16.mxu0 0
        %979 = vmatpush1.bf16.msra.mxu0 %v950
        %980 = vmatprep.subr.bf16.mxu0 0
        %981 = vmatpush1.bf16.msra.mxu0 %v951
        %982 = vmatprep.subr.bf16.mxu0 0
        %983 = vmatpush1.bf16.msra.mxu0 0
        %984 = vmatprep.subr.bf16.mxu0 0
        %985 = vmatpush1.bf16.msra.mxu0 0
        %986 = vmatprep.subr.bf16.mxu0 0
        %987 = vmatpush1.bf16.msra.mxu0 0
        %988 = vmatprep.subr.bf16.mxu0 0
        %989 = vmatpush1.bf16.msra.mxu0 0
        %990 = vmatprep.subr.bf16.mxu0 0
        %991 = vmatpush1.bf16.msra.mxu0 0
        %992 = vmatprep.subr.bf16.mxu0 0
        %993 = vmatpush1.bf16.msra.mxu0 0
        %994 = vmatprep.subr.bf16.mxu0 0
        %995 = vmatpush1.bf16.msra.mxu0 0
        %996 = vmatprep.mubr.bf16.mxu0 %v962
        %997 = vmatmul.mubr.bf16.gmra.mrb[0].mxu0 %v902
        %v998 = vpop.f32.mrb[0].mxu0
        %v999 = vadd.f32 0.0, %v998
        %v1000 = vpop.f32.mrb[0].mxu0
        %v1001 = vpop.f32.mrb[0].mxu0
        %v1002 = vadd.f32 0.0, %v1001
        %v1003 = vpop.f32.mrb[0].mxu0
        %1004 = vdwg.mxu0
        %v1005 = vadd.f32 %v863, %v999
        %v1006 = vadd.f32 %v866, %v1002
        %v1007 = vld [vmem:[%s4] sm:$0x1]
        %v1009 = vlaneseq
        %v1010 = vshrl.u32 %v1009, 7
        %v1011 = vsub.s32 0, %v1010
        %v1012 = vrot.slane %v1007, %v1011
        %v1014 = vadd.f32 %v1005, %v1012
        %v1015 = vadd.f32 %v1006, %v1012
        %v1016 = vmax.f32 %v1014, 0.0
        %v1017 = vmax.f32 %v1015, 0.0
        %1018 = vst [vmem:[%s247] sm:$0xff] %v1016
        %1019 = vst [vmem:[%s247 + $0x8] sm:$0xff] %v1017
        %s1020 = sand.u32 %s139, 1
        %s1021 = scalar_lea.sflag [#allocation5], %s1020
        %s1022 = sand.u32 %s139, 1
        %s1023 = smul.addr %s1022, 16
        %s1024 = scalar_lea.vmem [#allocation8], %s1023
        // Predicated region
        $region49: #{tpu_custom_call.1} parent=39 // pred_check
          %p1025 = pneg %p149
        $region50: #{tpu_custom_call.1} parent=39 // pred_check_branch
          %1027 = sbr.rel (%p1025) target = $region52
        $region51: #{tpu_custom_call.1} parent=39 // pred_region
          %s1029 = ssub.s32 256, 256
          %1030 = vsyncadd %s1021, %s1029
          %s1031 = smul.addr %s21, 2
          %s1032 = smul.addr %s1031, 128
          %s1033 = scalar_lea.hbm %s5, %s1032
          %s1034 = sshll.u32 %s1024, 4
          %s1035 = int_to_ptr.vmem [resolvable:$true] %s1034
          %1040 = dma.vmem_to_hbm [thread:$0]  %s1035, 256, %s1033, %s1021, 128, 128, 8
        $region52: #{tpu_custom_call.1} parent=39 // pred_fallthru
          _
      $region40: #{tpu_custom_call.1} parent=5 // pred_fallthru
        _
      %p1041 = scmp.le.s32.totalorder 2, %s16
      // Predicated region
      $region53: #{tpu_custom_call.1} parent=5 // pred_check
        %p1042 = pneg %p1041
      $region54: #{tpu_custom_call.1} parent=5 // pred_check_branch
        %1044 = sbr.rel (%p1042) target = $region56
      $region55: #{tpu_custom_call.1} parent=5 // pred_region
        %s1045 = ssub.s32 %s16, 2
        // Predicated region
        $region57: #{tpu_custom_call.1} parent=55 // pred_check
          %p1046 = pneg %p155
        $region58: #{tpu_custom_call.1} parent=55 // pred_check_branch
          %1048 = sbr.rel (%p1046) target = $region60
        $region59: #{tpu_custom_call.1} parent=55 // pred_region
          %s1049 = sand.u32 %s140, 1
          %s1050 = scalar_lea.sflag [#allocation5], %s1049
          %s1051 = sand.u32 %s140, 1
          %s1052 = smul.addr %s1051, 16
          %s1053 = scalar_lea.vmem [#allocation8], %s1052
          %1054 = dma.done %s1050, 256
        $region60: #{tpu_custom_call.1} parent=55 // pred_fallthru
          _
      $region56: #{tpu_custom_call.1} parent=5 // pred_fallthru
        _
    $region6: #{tpu_custom_call.1} parent=1 // loop_footer
      %s20 = sadd.s32 1, %s16
    $region7: #{tpu_custom_call.1} parent=1 // loop_footer_branch
      %15 = sbr.rel target = $region3
    $region8: #{tpu_custom_call.1} parent=1 // loop_exit
      _
    %1055 = vsyncpa [#allocation4], 1
    %s1056 = scalar_lea.sflag [#allocation4], 1
    %1057 = vsyncpa %s1056, 1
    %1058 = vsyncpa [#allocation7], 1
    %1059 = vsyncpa [#allocation5], 1
    %s1060 = scalar_lea.sflag [#allocation5], 1
    %1061 = vsyncpa %s1060, 1

</llo_original>
